<compile_context>
chip_gen: v5e
topology: v5e:2x2
jax: 0.10.0
libtpu: 0.0.40
codegen_flags: <defaults>
</compile_context>

<pallas_src>
import jax
import jax.numpy as jnp
from jax.experimental import pallas as pl
from jax.experimental.pallas import tpu as pltpu


def actor_kernel(xt_ref, w1_ref, b1_ref, w2_ref, b2_ref, ot_ref):
    # Transposed, lane-dense layout (batch on lanes):
    #   xt: (3, TB)  w1: (H, 3)  b1: (H, 1)  w2: (A, H)  b2: (A, 1)  ot: (A, TB)
    # fc1 + ReLU
    h = jnp.dot(w1_ref[...], xt_ref[...], preferred_element_type=jnp.float32)
    h = jnp.maximum(h + b1_ref[...], 0.0)                        # (H, TB)
    # fc2
    logits = jnp.dot(w2_ref[...], h, preferred_element_type=jnp.float32)
    logits = logits + b2_ref[...]                                # (A, TB)
    # softmax over the action axis (sublanes) == PyTorch softmax(dim=1)
    m = jnp.max(logits, axis=0, keepdims=True)                   # (1, TB)
    e = jnp.exp(logits - m)
    denom = jnp.sum(e, axis=0, keepdims=True)                    # (1, TB)
    # Exact divide: keeps each softmax row summing to 1 to fp rounding.
    ot_ref[...] = (e / denom).astype(ot_ref.dtype)


_SMALL_BATCH_MAX = 512  # gridless single-block path at/below this batch size


def _round_up(n, m):
    return ((n + m - 1) // m) * m


def actor_forward(x, w1, b1, w2, b2, *, block_b=8192, transposed_io=False):
    """Actor forward.  Weights use PyTorch nn.Linear layout:
       w1: (128, 3), b1: (128,), w2: (A, 128), b2: (A,).
       x: (B, 3) -> (B, A); with transposed_io=True, x: (3, B) -> (A, B)
       (skips the wrapper-side transposes for lane-dense callers)."""
    assert block_b % 128 == 0, "block_b must be a multiple of 128 lanes"
    H, K = w1.shape
    A = w2.shape[0]
    B = x.shape[1] if transposed_io else x.shape[0]

    b1c = b1.reshape(H, 1)
    b2c = b2.reshape(A, 1)

    if B <= _SMALL_BATCH_MAX:
        # Tiny batch: single full-array VMEM block, no grid / pipeline
        # scaffolding (pure fixed overhead at this size).
        xt = x if transposed_io else x.T
        ot = pl.pallas_call(
            actor_kernel,
            out_shape=jax.ShapeDtypeStruct((A, B), jnp.float32),
            in_specs=[pl.BlockSpec(memory_space=pltpu.MemorySpace.VMEM)
                      for _ in range(5)],
            out_specs=pl.BlockSpec(memory_space=pltpu.MemorySpace.VMEM),
        )(xt, w1, b1c, w2, b2c)
        return ot if transposed_io else ot.T

    # Throughput path: tile the batch (lane) axis; the tiny weights stay
    # VMEM-resident via constant index_maps.  Tile sizing:
    #   * large tiles (default up to 8192 lanes) amortize per-step overhead,
    #   * but never fewer than 2 tiles so the "parallel" batch axis can be
    #     sharded across v7x's two TensorCores.
    tile_b = min(block_b, _round_up(pl.cdiv(B, 2), 128))
    num_blocks = pl.cdiv(B, tile_b)
    Bp = num_blocks * tile_b

    # Fuse the tail pad into the transpose (single wrapper pass over x).
    # Padded columns compute harmless finite softmax rows, sliced off below.
    if transposed_io:
        xt = x if Bp == B else jnp.pad(x, ((0, 0), (0, Bp - B)))
    else:
        xp = x if Bp == B else jnp.pad(x, ((0, Bp - B), (0, 0)))
        xt = xp.T

    # VMEM budget from the actual footprint (2x double-buffered x/out tiles,
    # the (H, tile_b) f32 intermediate, resident weights) with 2x headroom;
    # ~9 MiB at tile_b=8192, well inside v7x's 64 MiB.
    row = 4 * tile_b
    footprint = (2 * (K * row + A * row)          # streamed x / out tiles
                 + H * row                        # h intermediate
                 + 2 * 4 * (H * K + H + A * H + A))  # resident weights
    vmem_limit = int(min(96 * 2**20, max(32 * 2**20, 2 * footprint)))

    ot = pl.pallas_call(
        actor_kernel,
        out_shape=jax.ShapeDtypeStruct((A, Bp), jnp.float32),
        grid=(num_blocks,),
        in_specs=[
            pl.BlockSpec((K, tile_b), lambda i: (0, i)),   # x tile: streamed
            pl.BlockSpec((H, K), lambda i: (0, 0)),        # weights: resident
            pl.BlockSpec((H, 1), lambda i: (0, 0)),
            pl.BlockSpec((A, H), lambda i: (0, 0)),
            pl.BlockSpec((A, 1), lambda i: (0, 0)),
        ],
        out_specs=pl.BlockSpec((A, tile_b), lambda i: (0, i)),
        compiler_params=pltpu.CompilerParams(
            dimension_semantics=("parallel",),   # shard batch tiles across TCs (v7x)
            vmem_limit_bytes=vmem_limit,
        ),
    )(xt, w1, b1c, w2, b2c)

    out = ot[:, :B]
    return out if transposed_io else out.T


def init_params(key, num_actions, hidden=128, in_features=3):
    # PyTorch nn.Linear default init: U(-1/sqrt(fan_in), 1/sqrt(fan_in)),
    # weights in (out_features, in_features) layout.
    k1, k2, k3, k4 = jax.random.split(key, 4)
    bound1 = 1.0 / jnp.sqrt(float(in_features))
    bound2 = 1.0 / jnp.sqrt(float(hidden))
    w1 = jax.random.uniform(k1, (hidden, in_features), jnp.float32, -bound1, bound1)
    b1 = jax.random.uniform(k2, (hidden,), jnp.float32, -bound1, bound1)
    w2 = jax.random.uniform(k3, (num_actions, hidden), jnp.float32, -bound2, bound2)
    b2 = jax.random.uniform(k4, (num_actions,), jnp.float32, -bound2, bound2)
    return w1, b1, w2, b2


if __name__ == "__main__":
    num_actions = 4

    key = jax.random.PRNGKey(0)
    kx, kp, kx2 = jax.random.split(key, 3)
    w1, b1, w2, b2 = init_params(kp, num_actions)

    def reference(x):
        h = jnp.maximum(x @ w1.T + b1, 0.0)
        return jax.nn.softmax(h @ w2.T + b2, axis=1)

    # --- small-batch path (gridless, full-array VMEM blocks) ---
    batch = 8
    x = jax.random.normal(kx, (batch, 3), dtype=jnp.float32)
    out = jax.block_until_ready(actor_forward(x, w1, b1, w2, b2))
    ref = reference(x)
    assert out.shape == (batch, num_actions)
    assert jnp.allclose(out, ref, atol=2e-3, rtol=2e-3)
    assert jnp.allclose(jnp.sum(out, axis=1), 1.0, atol=1e-5)

    # --- batch-tiled path (lane-dense tiles, resident weights, >=2 tiles, tail pad) ---
    big_batch = 640                     # -> 2 tiles of 384 lanes, exercises padding
    xb = jax.random.normal(kx2, (big_batch, 3), dtype=jnp.float32)
    out_b = jax.block_until_ready(actor_forward(xb, w1, b1, w2, b2))
    ref_b = reference(xb)
    assert out_b.shape == (big_batch, num_actions)
    assert jnp.allclose(out_b, ref_b, atol=2e-3, rtol=2e-3)
    assert jnp.allclose(jnp.sum(out_b, axis=1), 1.0, atol=1e-5)

    print("KERNEL_OK")
</pallas_src>

<mosaic_0001>
module attributes {stable_mosaic.version = 11 : i64} {
  func.func @actor_kernel(%arg0: memref<3x8xf32, #tpu.memory_space<vmem>>, %arg1: memref<128x3xf32, #tpu.memory_space<vmem>>, %arg2: memref<128x1xf32, #tpu.memory_space<vmem>>, %arg3: memref<4x128xf32, #tpu.memory_space<vmem>>, %arg4: memref<4x1xf32, #tpu.memory_space<vmem>>, %arg5: memref<4x8xf32, #tpu.memory_space<vmem>>) attributes {dimension_semantics = [], scalar_prefetch = 0 : i64, scratch_operands = 0 : i64, tpu.core_type = #tpu.core_type<tc>} {
    %c0 = arith.constant 0 : index
    %c0_0 = arith.constant 0 : index
    %0 = vector.load %arg1[%c0, %c0_0] : memref<128x3xf32, #tpu.memory_space<vmem>>, vector<128x3xf32>
    %c0_1 = arith.constant 0 : index
    %c0_2 = arith.constant 0 : index
    %1 = vector.load %arg0[%c0_1, %c0_2] : memref<3x8xf32, #tpu.memory_space<vmem>>, vector<3x8xf32>
    %cst = arith.constant dense<0.000000e+00> : vector<128x8xf32>
    %2 = tpu.matmul %0, %1, %cst {dimension_numbers = #tpu.dot_dimension_numbers<[1], [0], [0], [1], [0, 0, 1, 1], [], []>} : vector<128x3xf32>, vector<3x8xf32>, vector<128x8xf32> -> vector<128x8xf32>
    %c0_3 = arith.constant 0 : index
    %c0_4 = arith.constant 0 : index
    %3 = vector.load %arg2[%c0_3, %c0_4] : memref<128x1xf32, #tpu.memory_space<vmem>>, vector<128x1xf32>
    %4 = vector.broadcast %3 : vector<128x1xf32> to vector<128x8xf32>
    %5 = arith.addf %2, %4 : vector<128x8xf32>
    %cst_5 = arith.constant 0.000000e+00 : f32
    %6 = vector.broadcast %cst_5 : f32 to vector<128x8xf32>
    %7 = arith.maximumf %5, %6 : vector<128x8xf32>
    %c0_6 = arith.constant 0 : index
    %c0_7 = arith.constant 0 : index
    %8 = vector.load %arg3[%c0_6, %c0_7] : memref<4x128xf32, #tpu.memory_space<vmem>>, vector<4x128xf32>
    %cst_8 = arith.constant dense<0.000000e+00> : vector<4x8xf32>
    %9 = tpu.matmul %8, %7, %cst_8 {dimension_numbers = #tpu.dot_dimension_numbers<[1], [0], [0], [1], [0, 0, 1, 1], [], []>} : vector<4x128xf32>, vector<128x8xf32>, vector<4x8xf32> -> vector<4x8xf32>
    %c0_9 = arith.constant 0 : index
    %c0_10 = arith.constant 0 : index
    %10 = vector.load %arg4[%c0_9, %c0_10] : memref<4x1xf32, #tpu.memory_space<vmem>>, vector<4x1xf32>
    %11 = vector.broadcast %10 : vector<4x1xf32> to vector<4x8xf32>
    %12 = arith.addf %9, %11 : vector<4x8xf32>
    %cst_11 = arith.constant dense<0xFF800000> : vector<8xf32>
    %13 = vector.multi_reduction <maximumf>, %12, %cst_11 [0] : vector<4x8xf32> to vector<8xf32>
    %14 = vector.shape_cast %13 : vector<8xf32> to vector<1x8xf32>
    %15 = vector.broadcast %14 : vector<1x8xf32> to vector<4x8xf32>
    %16 = arith.subf %12, %15 : vector<4x8xf32>
    %17 = math.exp %16 : vector<4x8xf32>
    %cst_12 = arith.constant dense<0.000000e+00> : vector<8xf32>
    %18 = vector.multi_reduction <add>, %17, %cst_12 [0] : vector<4x8xf32> to vector<8xf32>
    %19 = vector.shape_cast %18 : vector<8xf32> to vector<1x8xf32>
    %20 = vector.broadcast %19 : vector<1x8xf32> to vector<4x8xf32>
    %21 = arith.divf %17, %20 : vector<4x8xf32>
    %c0_13 = arith.constant 0 : index
    %c0_14 = arith.constant 0 : index
    %22 = vector.load %arg5[%c0_13, %c0_14] : memref<4x8xf32, #tpu.memory_space<vmem>>, vector<4x8xf32>
    tpu.vector_store %arg5[%c0_13, %c0_14], %21 {strides = array<i32>} : memref<4x8xf32, #tpu.memory_space<vmem>>, vector<4x8xf32>,
    return
  }
}

</mosaic_0001>

<llo_original>
// kernel: tpu_custom_call.1
$region0: #{tpu_custom_call.1}
  #allocation0 [shape = 'u32[]', space=smem, size = 0x4, offset = 0x4, fixed_abs, tag = 'smem constant byte address 0x4 - core index']
  #allocation1 [shape = 'u32[72,128]{1,0:T(1,128)}', space=vmem, size = 0x9000, scoped, tag = 'internal scratch']
  %s0 = inlined_call_operand.vmem [shape: f32[3,8], index: 0, kind: input, shape index: {}]
  %s1 = inlined_call_operand.vmem [shape: f32[128,3], index: 1, kind: input, shape index: {}]
  %s2 = inlined_call_operand.vmem [shape: f32[128,1], index: 2, kind: input, shape index: {}]
  %s3 = inlined_call_operand.vmem [shape: f32[4,128], index: 3, kind: input, shape index: {}]
  %s4 = inlined_call_operand.vmem [shape: f32[4,1], index: 4, kind: input, shape index: {}]
  %s5 = inlined_call_operand.hbm [shape: f32[4,8], index: 5, kind: output, shape index: {}]
  %s6 = sld [smem:[#allocation0]]
  $region30: #{tpu_custom_call.1} parent=0
    _
  %s8 = ssub.s32 1, %s6
  %s9 = scalar_select 0, %s8, %s6
  $region1: #{tpu_custom_call.1} parent=0
    #allocation2 [shape = 'u8[2048]{0}', space=vmem, size = 0x800, scoped, tag = 'output window, operand 0, single buffered']
    #allocation3 [shape = 's32[1]{0}', space=sflag, size = 0x4, scoped, tag = 'scoped memory for tpu_custom_call.1']
    %10 = vsyncpa [#allocation3], 0
    // Predicated region
    $region2: #{tpu_custom_call.1} parent=1 // pred_check
      _
    $region3: #{tpu_custom_call.1} parent=1 // pred_check_branch
      %12 = sbr.rel (0) target = $region5
    $region4: #{tpu_custom_call.1} parent=1 // pred_region
      _
    $region5: #{tpu_custom_call.1} parent=1 // pred_fallthru
      _
    // Predicated region
    $region6: #{tpu_custom_call.1} parent=1 // pred_check
      _
    $region7: #{tpu_custom_call.1} parent=1 // pred_check_branch
      %14 = sbr.rel (0) target = $region9
    $region8: #{tpu_custom_call.1} parent=1 // pred_region
      _
    $region9: #{tpu_custom_call.1} parent=1 // pred_fallthru
      _
    // Predicated region
    $region10: #{tpu_custom_call.1} parent=1 // pred_check
      _
    $region11: #{tpu_custom_call.1} parent=1 // pred_check_branch
      %16 = sbr.rel (0) target = $region13
    $region12: #{tpu_custom_call.1} parent=1 // pred_region
      _
    $region13: #{tpu_custom_call.1} parent=1 // pred_fallthru
      _
    // Predicated region
    $region14: #{tpu_custom_call.1} parent=1 // pred_check
      _
    $region15: #{tpu_custom_call.1} parent=1 // pred_check_branch
      %18 = sbr.rel (0) target = $region17
    $region16: #{tpu_custom_call.1} parent=1 // pred_region
      _
    $region17: #{tpu_custom_call.1} parent=1 // pred_fallthru
      _
    // Predicated region
    $region18: #{tpu_custom_call.1} parent=1 // pred_check
      _
    $region19: #{tpu_custom_call.1} parent=1 // pred_check_branch
      %20 = sbr.rel (0) target = $region21
    $region20: #{tpu_custom_call.1} parent=1 // pred_region
      _
    $region21: #{tpu_custom_call.1} parent=1 // pred_fallthru
      _
    %v21 = vld [vmem:[%s1] sm:$0xff]
    %v22 = vld [vmem:[%s1 + $0x8] sm:$0xff]
    %v23 = vld [vmem:[%s1 + $0x10] sm:$0xff]
    %v24 = vld [vmem:[%s1 + $0x18] sm:$0xff]
    %v25 = vld [vmem:[%s1 + $0x20] sm:$0xff]
    %v26 = vld [vmem:[%s1 + $0x28] sm:$0xff]
    %v27 = vld [vmem:[%s1 + $0x30] sm:$0xff]
    %v28 = vld [vmem:[%s1 + $0x38] sm:$0xff]
    %v29 = vld [vmem:[%s1 + $0x40] sm:$0xff]
    %v30 = vld [vmem:[%s1 + $0x48] sm:$0xff]
    %v31 = vld [vmem:[%s1 + $0x50] sm:$0xff]
    %v32 = vld [vmem:[%s1 + $0x58] sm:$0xff]
    %v33 = vld [vmem:[%s1 + $0x60] sm:$0xff]
    %v34 = vld [vmem:[%s1 + $0x68] sm:$0xff]
    %v35 = vld [vmem:[%s1 + $0x70] sm:$0xff]
    %v36 = vld [vmem:[%s1 + $0x78] sm:$0xff]
    %v37 = vld [vmem:[%s0] sm:$0x7]
    %v38 = vld [vmem:[%s2] sm:$0xff]
    %v39 = vld [vmem:[%s2 + $0x8] sm:$0xff]
    %v40 = vld [vmem:[%s2 + $0x10] sm:$0xff]
    %v41 = vld [vmem:[%s2 + $0x18] sm:$0xff]
    %v42 = vld [vmem:[%s2 + $0x20] sm:$0xff]
    %v43 = vld [vmem:[%s2 + $0x28] sm:$0xff]
    %v44 = vld [vmem:[%s2 + $0x30] sm:$0xff]
    %v45 = vld [vmem:[%s2 + $0x38] sm:$0xff]
    %v46 = vld [vmem:[%s2 + $0x40] sm:$0xff]
    %v47 = vld [vmem:[%s2 + $0x48] sm:$0xff]
    %v48 = vld [vmem:[%s2 + $0x50] sm:$0xff]
    %v49 = vld [vmem:[%s2 + $0x58] sm:$0xff]
    %v50 = vld [vmem:[%s2 + $0x60] sm:$0xff]
    %v51 = vld [vmem:[%s2 + $0x68] sm:$0xff]
    %v52 = vld [vmem:[%s2 + $0x70] sm:$0xff]
    %v53 = vld [vmem:[%s2 + $0x78] sm:$0xff]
    %55 = vset.pattern.permute.xlu0 0
    %56 = vperm.xlu0 %55, %v38
    %v57 = vpop.permute.xlu0 %56
    %60 = vset.pattern.permute.xlu0 0
    %61 = vperm.xlu0 %60, %v39
    %v62 = vpop.permute.xlu0 %61
    %65 = vset.pattern.permute.xlu0 0
    %66 = vperm.xlu0 %65, %v40
    %v67 = vpop.permute.xlu0 %66
    %70 = vset.pattern.permute.xlu0 0
    %71 = vperm.xlu0 %70, %v41
    %v72 = vpop.permute.xlu0 %71
    %75 = vset.pattern.permute.xlu0 0
    %76 = vperm.xlu0 %75, %v42
    %v77 = vpop.permute.xlu0 %76
    %80 = vset.pattern.permute.xlu0 0
    %81 = vperm.xlu0 %80, %v43
    %v82 = vpop.permute.xlu0 %81
    %85 = vset.pattern.permute.xlu0 0
    %86 = vperm.xlu0 %85, %v44
    %v87 = vpop.permute.xlu0 %86
    %90 = vset.pattern.permute.xlu0 0
    %91 = vperm.xlu0 %90, %v45
    %v92 = vpop.permute.xlu0 %91
    %95 = vset.pattern.permute.xlu0 0
    %96 = vperm.xlu0 %95, %v46
    %v97 = vpop.permute.xlu0 %96
    %100 = vset.pattern.permute.xlu0 0
    %101 = vperm.xlu0 %100, %v47
    %v102 = vpop.permute.xlu0 %101
    %105 = vset.pattern.permute.xlu0 0
    %106 = vperm.xlu0 %105, %v48
    %v107 = vpop.permute.xlu0 %106
    %110 = vset.pattern.permute.xlu0 0
    %111 = vperm.xlu0 %110, %v49
    %v112 = vpop.permute.xlu0 %111
    %115 = vset.pattern.permute.xlu0 0
    %116 = vperm.xlu0 %115, %v50
    %v117 = vpop.permute.xlu0 %116
    %120 = vset.pattern.permute.xlu0 0
    %121 = vperm.xlu0 %120, %v51
    %v122 = vpop.permute.xlu0 %121
    %125 = vset.pattern.permute.xlu0 0
    %126 = vperm.xlu0 %125, %v52
    %v127 = vpop.permute.xlu0 %126
    %130 = vset.pattern.permute.xlu0 0
    %131 = vperm.xlu0 %130, %v53
    %v132 = vpop.permute.xlu0 %131
    %vm134 = vcmask 23552
    %v136 = vsel %vm134, %v21, 0
    %v139 = vsel %vm134, %v22, 0
    %v142 = vsel %vm134, %v23, 0
    %v145 = vsel %vm134, %v24, 0
    %v148 = vsel %vm134, %v25, 0
    %v151 = vsel %vm134, %v26, 0
    %v154 = vsel %vm134, %v27, 0
    %v157 = vsel %vm134, %v28, 0
    %v160 = vsel %vm134, %v29, 0
    %v163 = vsel %vm134, %v30, 0
    %v166 = vsel %vm134, %v31, 0
    %v169 = vsel %vm134, %v32, 0
    %v172 = vsel %vm134, %v33, 0
    %v175 = vsel %vm134, %v34, 0
    %v178 = vsel %vm134, %v35, 0
    %v181 = vsel %vm134, %v36, 0
    %vm183 = vcmask 1042432
    %v185 = vsel %vm183, %v37, 0
    %187 = vmatpush.msra.mxu0 0.0
    %188 = vmatpush.msra.mxu0 0.0
    %189 = vmatpush.msra.mxu0 0.0
    %190 = vmatpush.msra.mxu0 0.0
    %191 = vmatpush.msra.mxu0 0.0
    %192 = vmatpush.msra.mxu0 0.0
    %193 = vmatpush.msra.mxu0 0.0
    %194 = vmatpush.msra.mxu0 0.0
    %195 = vmatpush.msra.mxu0 0.0
    %196 = vmatpush.msra.mxu0 0.0
    %197 = vmatpush.msra.mxu0 0.0
    %198 = vmatpush.msra.mxu0 0.0
    %199 = vmatpush.msra.mxu0 0.0
    %200 = vmatpush.msra.mxu0 0.0
    %201 = vmatpush.msra.mxu0 0.0
    %202 = vmatpush.msra.mxu0 %v185
    %203 = vmatmul.f32.gmra.mxu0 %v136
    %v204 = vpop.f32.mrf.mxu0
    %v205 = vadd.f32 %v57, %v204
    %206 = vmatmul.f32.gmra.mxu0 %v139
    %v207 = vpop.f32.mrf.mxu0
    %v208 = vadd.f32 %v62, %v207
    %209 = vmatmul.f32.gmra.mxu0 %v142
    %v210 = vpop.f32.mrf.mxu0
    %v211 = vadd.f32 %v67, %v210
    %212 = vmatmul.f32.gmra.mxu0 %v145
    %v213 = vpop.f32.mrf.mxu0
    %v214 = vadd.f32 %v72, %v213
    %215 = vmatmul.f32.gmra.mxu0 %v148
    %v216 = vpop.f32.mrf.mxu0
    %v217 = vadd.f32 %v77, %v216
    %218 = vmatmul.f32.gmra.mxu0 %v151
    %v219 = vpop.f32.mrf.mxu0
    %v220 = vadd.f32 %v82, %v219
    %221 = vmatmul.f32.gmra.mxu0 %v154
    %v222 = vpop.f32.mrf.mxu0
    %v223 = vadd.f32 %v87, %v222
    %224 = vmatmul.f32.gmra.mxu0 %v157
    %v225 = vpop.f32.mrf.mxu0
    %v226 = vadd.f32 %v92, %v225
    %227 = vmatmul.f32.gmra.mxu0 %v160
    %v228 = vpop.f32.mrf.mxu0
    %v229 = vadd.f32 %v97, %v228
    %230 = vmatmul.f32.gmra.mxu0 %v163
    %v231 = vpop.f32.mrf.mxu0
    %v232 = vadd.f32 %v102, %v231
    %233 = vmatmul.f32.gmra.mxu0 %v166
    %v234 = vpop.f32.mrf.mxu0
    %v235 = vadd.f32 %v107, %v234
    %236 = vmatmul.f32.gmra.mxu0 %v169
    %v237 = vpop.f32.mrf.mxu0
    %v238 = vadd.f32 %v112, %v237
    %239 = vmatmul.f32.gmra.mxu0 %v172
    %v240 = vpop.f32.mrf.mxu0
    %v241 = vadd.f32 %v117, %v240
    %242 = vmatmul.f32.gmra.mxu0 %v175
    %v243 = vpop.f32.mrf.mxu0
    %v244 = vadd.f32 %v122, %v243
    %245 = vmatmul.f32.gmra.mxu0 %v178
    %v246 = vpop.f32.mrf.mxu0
    %v247 = vadd.f32 %v127, %v246
    %248 = vmatmul.f32.gmra.mxu0 %v181
    %v249 = vpop.f32.mrf.mxu0
    %v250 = vadd.f32 %v132, %v249
    %251 = vdwg.mxu0
    %v252 = vmax.f32 %v205, 0.0
    %v253 = vmax.f32 %v208, 0.0
    %v254 = vmax.f32 %v211, 0.0
    %v255 = vmax.f32 %v214, 0.0
    %v256 = vmax.f32 %v217, 0.0
    %v257 = vmax.f32 %v220, 0.0
    %v258 = vmax.f32 %v223, 0.0
    %v259 = vmax.f32 %v226, 0.0
    %v260 = vmax.f32 %v229, 0.0
    %v261 = vmax.f32 %v232, 0.0
    %v262 = vmax.f32 %v235, 0.0
    %v263 = vmax.f32 %v238, 0.0
    %v264 = vmax.f32 %v241, 0.0
    %v265 = vmax.f32 %v244, 0.0
    %v266 = vmax.f32 %v247, 0.0
    %v267 = vmax.f32 %v250, 0.0
    %v268 = vld [vmem:[%s3] sm:$0xf]
    %v269 = vld [vmem:[%s4] sm:$0xf]
    %271 = vset.pattern.permute.xlu0 0
    %272 = vperm.xlu0 %271, %v269
    %v273 = vpop.permute.xlu0 %272
    %275 = vmatpush.msra.mxu0 %v267
    %276 = vmatpush.msra.mxu0 %v266
    %277 = vmatpush.msra.mxu0 %v265
    %278 = vmatpush.msra.mxu0 %v264
    %279 = vmatpush.msra.mxu0 %v263
    %280 = vmatpush.msra.mxu0 %v262
    %281 = vmatpush.msra.mxu0 %v261
    %282 = vmatpush.msra.mxu0 %v260
    %283 = vmatpush.msra.mxu0 %v259
    %284 = vmatpush.msra.mxu0 %v258
    %285 = vmatpush.msra.mxu0 %v257
    %286 = vmatpush.msra.mxu0 %v256
    %287 = vmatpush.msra.mxu0 %v255
    %288 = vmatpush.msra.mxu0 %v254
    %289 = vmatpush.msra.mxu0 %v253
    %290 = vmatpush.msra.mxu0 %v252
    %291 = vmatmul.f32.gmra.mxu0 %v268
    %v292 = vpop.f32.mrf.mxu0
    %v293 = vadd.f32 %v273, %v292
    %294 = vdwg.mxu0
    %vm295 = vcmask 60416
    %v296 = vsel %vm295, %v293, -inf
    %v297 = vrot.slane %v296, 4
    %v298 = vmax.f32 %v296, %v297
    %v299 = vrot.slane %v298, 2
    %v300 = vmax.f32 %v298, %v299
    %v301 = vrot.slane %v300, 1
    %v302 = vmax.f32 %v300, %v301
    %v303 = vsub.f32 %v293, %v302
    %v304 = vmul.f32 %v303, 1.442695
    %v305 = vpow.pop %v304
    %v306 = vsel %vm295, %v305, 0.0
    %v307 = vrot.slane %v306, 4
    %v308 = vadd.f32 %v306, %v307
    %v309 = vrot.slane %v308, 2
    %v310 = vadd.f32 %v308, %v309
    %v311 = vrot.slane %v310, 1
    %v312 = vadd.f32 %v310, %v311
    %v313 = vrcp.pop %v312
    %v314 = vmul.f32 %v312, %v313
    %v315 = vsub.f32 1.0, %v314
    %v316 = vmul.f32 %v313, %v315
    %v317 = vadd.f32 %v313, %v316
    %vm318 = vweird.f32 %v312
    %vm319 = vweird.f32 %v313
    %vm320 = vmor %vm318, %vm319
    %v321 = vsel %vm320, %v313, %v317
    %v322 = vand.u32 2147483647, %v312
    %vm323 = vcmp.eq.f32.partialorder %v322, 8.507059e+37
    %v324 = vand.u32 %v312, 2147483648
    %v325 = vor.u32 1.1754944e-38, %v324
    %v326 = vsel %vm323, %v325, %v321
    %v327 = vmul.f32 %v305, %v326
    %328 = vst.msk [vmem:[#allocation2] sm:$0xf] %vm295, %v327
    // Predicated region
    $region22: #{tpu_custom_call.1} parent=1 // pred_check
      _
    $region23: #{tpu_custom_call.1} parent=1 // pred_check_branch
      %330 = sbr.rel (0) target = $region25
    $region24: #{tpu_custom_call.1} parent=1 // pred_region
      %332 = vsyncadd [#allocation3], 0
      %s334 = sshll.u32 [#allocation2], 4
      %s335 = int_to_ptr.vmem [resolvable:$true] %s334
      %s336 = sshll.u32 %s5, 4
      %s337 = int_to_ptr.hbm [resolvable:$true] %s336
      %339 = dma.vmem_to_hbm [thread:$0]  %s335, 64, %s337, [#allocation3]
    $region25: #{tpu_custom_call.1} parent=1 // pred_fallthru
      _
    // Predicated region
    $region26: #{tpu_custom_call.1} parent=1 // pred_check
      _
    $region27: #{tpu_custom_call.1} parent=1 // pred_check_branch
      %341 = sbr.rel (0) target = $region29
    $region28: #{tpu_custom_call.1} parent=1 // pred_region
      %343 = dma.done [#allocation3], 64
    $region29: #{tpu_custom_call.1} parent=1 // pred_fallthru
      _
    %344 = vsyncpa [#allocation3], 1

</llo_original>
